<compile_context>
chip_gen: v6e
topology: v6e:2x2x1
jax: 0.10.0
libtpu: 0.0.40
codegen_flags: <defaults>
</compile_context>

<pallas_src>
import functools

import jax
import jax.numpy as jnp
from jax.experimental import pallas as pl
from jax.experimental.pallas import tpu as pltpu

_PAIRWISE_EPS = 1e-6  # matches torch.nn.PairwiseDistance default eps


def _round_up(x, m):
    return ((x + m - 1) // m) * m


def _contrastive_kernel(a_ref, p_ref, n_ref, out_ref, acc_ref, *,
                        pos_margin, neg_margin, num_valid, tile_t):
    """Processes one (D, tile_t) column-block of triplets.

    Layout: embedding dim D on sublanes, triplets on the 128-lane axis, so the
    subtract / square / relu path is lane-dense even for small D.  The grid
    axis iterates over triplet blocks; a (1, 1) VMEM scratch carries the
    running sum of per-triplet hinge terms across grid steps.
    """
    i = pl.program_id(0)

    @pl.when(i == 0)
    def _init():
        acc_ref[...] = jnp.zeros_like(acc_ref)

    a = a_ref[...].astype(jnp.float32)   # (D, tile_t)
    p = p_ref[...].astype(jnp.float32)
    n = n_ref[...].astype(jnp.float32)

    # torch.nn.PairwiseDistance(p=2): ||x1 - x2 + eps||_2 along D (axis 0 here).
    dpos = a - p + _PAIRWISE_EPS
    dneg = a - n + _PAIRWISE_EPS
    dist_pos = jnp.sqrt(jnp.sum(dpos * dpos, axis=0, keepdims=True))  # (1, tile_t)
    dist_neg = jnp.sqrt(jnp.sum(dneg * dneg, axis=0, keepdims=True))  # (1, tile_t)

    pos_term = jnp.maximum(dist_pos - pos_margin, 0.0)
    neg_term = jnp.maximum(neg_margin - dist_neg, 0.0)

    # Mask padded columns of the ragged last tile (zero-padded rows would
    # otherwise each contribute ~relu(neg_margin) to the sum).
    col = i * tile_t + jax.lax.broadcasted_iota(jnp.int32, (1, tile_t), 1)
    contrib = jnp.where(col < num_valid, pos_term + neg_term, 0.0)

    acc_ref[...] += jnp.sum(contrib, keepdims=True)

    @pl.when(i == pl.num_programs(0) - 1)
    def _finalize():
        # mean(pos) + mean(neg) == (sum(pos) + sum(neg)) / T  -> one multiply.
        out_ref[...] = acc_ref[...] * jnp.float32(1.0 / num_valid)


def contrastive_loss(batch, anchors, positives, negatives,
                     pos_margin=0.0, neg_margin=1.0,
                     stop_pos=False, stop_neg=False, tile_t=None):
    """Pallas implementation of Criterion.forward given sampled triplets.

    batch:      (N, D) float embeddings
    anchors / positives / negatives: (T,) int32 indices into batch
    """
    batch = jnp.asarray(batch)
    N, D = batch.shape
    anchors = jnp.asarray(anchors, dtype=jnp.int32)
    positives = jnp.asarray(positives, dtype=jnp.int32)
    negatives = jnp.asarray(negatives, dtype=jnp.int32)
    T = int(anchors.shape[0])

    # stop_pos / stop_neg only change gradients (detach); forward is identical.
    # TODO(synk): wrap in jax.custom_vjp (pure-JAX backward) if used under jax.grad.
    a = jnp.take(batch, anchors, axis=0)
    p = jnp.take(batch, positives, axis=0)
    n = jnp.take(batch, negatives, axis=0)
    if stop_pos:
        p = jax.lax.stop_gradient(p)
    if stop_neg:
        n = jax.lax.stop_gradient(n)

    # Lane-dense layout: (D, T) with triplets on the 128-lane axis.
    # TODO(synk): for large D the gather could be fused into the kernel
    # (PrefetchScalarGridSpec + per-row DMA); for small D the wrapper gather
    # plus tiled kernel is the cheaper option (avoids per-row grid overhead).
    a_t, p_t, n_t = a.T, p.T, n.T

    itemsize = jnp.dtype(batch.dtype).itemsize
    if tile_t is None:
        # Keep 3 inputs x 2 pipeline buffers under ~8 MiB (safe on v5e's 16 MiB
        # scoped default and v7x's 64 MiB physical VMEM).
        budget = 8 * 1024 * 1024
        t = budget // max(3 * 2 * D * itemsize, 1)
        tile_t = max(128, min(1024, (t // 128) * 128))
    tile_t = int(min(tile_t, _round_up(T, 128)))
    assert tile_t % 128 == 0

    t_pad = _round_up(T, tile_t)
    if t_pad != T:
        pad = ((0, 0), (0, t_pad - T))
        a_t = jnp.pad(a_t, pad)
        p_t = jnp.pad(p_t, pad)
        n_t = jnp.pad(n_t, pad)

    grid = (t_pad // tile_t,)
    kernel = functools.partial(
        _contrastive_kernel,
        pos_margin=float(pos_margin),
        neg_margin=float(neg_margin),
        num_valid=T,
        tile_t=tile_t,
    )

    block = pl.BlockSpec((D, tile_t), lambda i: (0, i))
    # TODO(synk): on v7x (2 TCs) a two-stage reduction with a 'parallel' grid
    # axis (per-block lane-dense partials + tiny jnp.sum in the wrapper) would
    # use both TensorCores; single-TC v5e/v6e are already optimal this way.
    out = pl.pallas_call(
        kernel,
        out_shape=jax.ShapeDtypeStruct((1, 1), jnp.float32),
        grid_spec=pltpu.PrefetchScalarGridSpec(
            num_scalar_prefetch=0,
            grid=grid,
            in_specs=[block, block, block],
            out_specs=pl.BlockSpec((1, 1), lambda i: (0, 0)),
            scratch_shapes=[pltpu.VMEM((1, 1), jnp.float32)],
        ),
        compiler_params=pltpu.CompilerParams(
            dimension_semantics=("arbitrary",),
            vmem_limit_bytes=32 * 1024 * 1024,
        ),
    )(a_t, p_t, n_t)
    return out[0, 0]


def _sample_triplets(labels):
    """Deterministic stand-in for the batch-mining `sampling` callable.

    For each index i (anchor), pick the first other index with the same label
    as positive and the first index with a different label as negative.
    """
    labels = [int(x) for x in labels]
    triplets = []
    for i, li in enumerate(labels):
        pos = next((j for j, lj in enumerate(labels) if j != i and lj == li), None)
        neg = next((j for j, lj in enumerate(labels) if lj != li), None)
        if pos is not None and neg is not None:
            triplets.append((i, pos, neg))
    return triplets


def _reference_loss(batch, anchors, positives, negatives, pos_margin, neg_margin):
    a = batch[anchors]
    p = batch[positives]
    n = batch[negatives]
    dp = jnp.sqrt(jnp.sum((a - p + _PAIRWISE_EPS) ** 2, axis=-1))
    dn = jnp.sqrt(jnp.sum((a - n + _PAIRWISE_EPS) ** 2, axis=-1))
    return (jnp.mean(jnp.maximum(dp - pos_margin, 0.0))
            + jnp.mean(jnp.maximum(neg_margin - dn, 0.0)))


if __name__ == "__main__":
    key = jax.random.PRNGKey(0)

    # --- Test 1: small label-mined triplets (mirrors the module's usage) ---
    N, D = 8, 32
    k_emb, key = jax.random.split(key)
    batch = jax.random.normal(k_emb, (N, D), dtype=jnp.float32)
    batch = batch / jnp.linalg.norm(batch, axis=-1, keepdims=True)

    labels = [0, 0, 1, 1, 2, 2, 3, 3]
    triplets = _sample_triplets(labels)
    anchors = jnp.asarray([t[0] for t in triplets], dtype=jnp.int32)
    positives = jnp.asarray([t[1] for t in triplets], dtype=jnp.int32)
    negatives = jnp.asarray([t[2] for t in triplets], dtype=jnp.int32)

    loss = contrastive_loss(batch, anchors, positives, negatives,
                            pos_margin=0.0, neg_margin=1.0,
                            stop_pos=False, stop_neg=False)
    loss = jax.block_until_ready(loss)
    ref = _reference_loss(batch, anchors, positives, negatives, 0.0, 1.0)
    assert jnp.allclose(loss, ref, atol=1e-5, rtol=1e-5), (loss, ref)

    # --- Test 2: multi-block grid + ragged tail (T=300, tile_t=128 -> 3 blocks) ---
    N2, D2, T2 = 64, 48, 300
    k_emb2, k_a, k_p, k_n = jax.random.split(key, 4)
    batch2 = jax.random.normal(k_emb2, (N2, D2), dtype=jnp.float32)
    batch2 = batch2 / jnp.linalg.norm(batch2, axis=-1, keepdims=True)
    anchors2 = jax.random.randint(k_a, (T2,), 0, N2, dtype=jnp.int32)
    positives2 = jax.random.randint(k_p, (T2,), 0, N2, dtype=jnp.int32)
    negatives2 = jax.random.randint(k_n, (T2,), 0, N2, dtype=jnp.int32)

    loss2 = contrastive_loss(batch2, anchors2, positives2, negatives2,
                             pos_margin=0.1, neg_margin=0.9, tile_t=128)
    loss2 = jax.block_until_ready(loss2)
    ref2 = _reference_loss(batch2, anchors2, positives2, negatives2, 0.1, 0.9)
    assert jnp.allclose(loss2, ref2, atol=1e-5, rtol=1e-5), (loss2, ref2)

    print("KERNEL_OK")
</pallas_src>

<mosaic_0001>
module attributes {stable_mosaic.version = 11 : i64} {
  func.func @_contrastive_kernel(%arg0: i32, %arg1: memref<32x128xf32, #tpu.memory_space<vmem>>, %arg2: memref<32x128xf32, #tpu.memory_space<vmem>>, %arg3: memref<32x128xf32, #tpu.memory_space<vmem>>, %arg4: memref<1x1xf32, #tpu.memory_space<vmem>>, %arg5: memref<1x1xf32, #tpu.memory_space<vmem>>) attributes {dimension_semantics = [#tpu.dimension_semantics<arbitrary>], iteration_bounds = array<i64: 1>, scalar_prefetch = 0 : i64, scratch_operands = 1 : i64, tpu.core_type = #tpu.core_type<tc>, window_params = [{transform_indices = @transform_0, window_bounds = array<i64: 32, 128>}, {transform_indices = @transform_1, window_bounds = array<i64: 32, 128>}, {transform_indices = @transform_2, window_bounds = array<i64: 32, 128>}, {pipeline_mode = #tpu.pipeline_mode<synchronous>, transform_indices = @transform_3, window_bounds = array<i64: 1, 1>}]} {
    %c0_i32 = arith.constant 0 : i32
    %0 = arith.cmpi eq, %arg0, %c0_i32 : i32
    %1 = arith.extui %0 : i1 to i32
    %c0_i32_0 = arith.constant 0 : i32
    %2 = arith.cmpi ne, %1, %c0_i32_0 : i32
    scf.if %2 {
      %cst_21 = arith.constant 0.000000e+00 : f32
      %48 = vector.broadcast %cst_21 : f32 to vector<1x1xf32>
      %c0_22 = arith.constant 0 : index
      %c0_23 = arith.constant 0 : index
      %49 = vector.load %arg5[%c0_22, %c0_23] : memref<1x1xf32, #tpu.memory_space<vmem>>, vector<1x1xf32>
      tpu.vector_store %arg5[%c0_22, %c0_23], %48 {strides = array<i32>} : memref<1x1xf32, #tpu.memory_space<vmem>>, vector<1x1xf32>,
    } else {
    }
    %c0 = arith.constant 0 : index
    %c0_1 = arith.constant 0 : index
    %3 = vector.load %arg1[%c0, %c0_1] : memref<32x128xf32, #tpu.memory_space<vmem>>, vector<32x128xf32>
    %c0_2 = arith.constant 0 : index
    %c0_3 = arith.constant 0 : index
    %4 = vector.load %arg2[%c0_2, %c0_3] : memref<32x128xf32, #tpu.memory_space<vmem>>, vector<32x128xf32>
    %c0_4 = arith.constant 0 : index
    %c0_5 = arith.constant 0 : index
    %5 = vector.load %arg3[%c0_4, %c0_5] : memref<32x128xf32, #tpu.memory_space<vmem>>, vector<32x128xf32>
    %6 = arith.subf %3, %4 : vector<32x128xf32>
    %cst = arith.constant 9.99999997E-7 : f32
    %7 = vector.broadcast %cst : f32 to vector<32x128xf32>
    %8 = arith.addf %6, %7 : vector<32x128xf32>
    %9 = arith.subf %3, %5 : vector<32x128xf32>
    %cst_6 = arith.constant 9.99999997E-7 : f32
    %10 = vector.broadcast %cst_6 : f32 to vector<32x128xf32>
    %11 = arith.addf %9, %10 : vector<32x128xf32>
    %12 = arith.mulf %8, %8 : vector<32x128xf32>
    %cst_7 = arith.constant dense<0.000000e+00> : vector<128xf32>
    %13 = vector.multi_reduction <add>, %12, %cst_7 [0] : vector<32x128xf32> to vector<128xf32>
    %14 = vector.shape_cast %13 : vector<128xf32> to vector<1x128xf32>
    %15 = math.sqrt %14 : vector<1x128xf32>
    %16 = arith.mulf %11, %11 : vector<32x128xf32>
    %cst_8 = arith.constant dense<0.000000e+00> : vector<128xf32>
    %17 = vector.multi_reduction <add>, %16, %cst_8 [0] : vector<32x128xf32> to vector<128xf32>
    %18 = vector.shape_cast %17 : vector<128xf32> to vector<1x128xf32>
    %19 = math.sqrt %18 : vector<1x128xf32>
    %cst_9 = arith.constant 0.000000e+00 : f32
    %20 = vector.broadcast %cst_9 : f32 to vector<1x128xf32>
    %21 = arith.subf %15, %20 : vector<1x128xf32>
    %cst_10 = arith.constant 0.000000e+00 : f32
    %22 = vector.broadcast %cst_10 : f32 to vector<1x128xf32>
    %23 = arith.maximumf %21, %22 : vector<1x128xf32>
    %cst_11 = arith.constant 1.000000e+00 : f32
    %24 = vector.broadcast %cst_11 : f32 to vector<1x128xf32>
    %25 = arith.subf %24, %19 : vector<1x128xf32>
    %cst_12 = arith.constant 0.000000e+00 : f32
    %26 = vector.broadcast %cst_12 : f32 to vector<1x128xf32>
    %27 = arith.maximumf %25, %26 : vector<1x128xf32>
    %c128_i32 = arith.constant 128 : i32
    %28 = arith.muli %arg0, %c128_i32 : i32
    %29 = tpu.iota {dimensions = array<i32: 1>} : vector<1x128xi32>
    %30 = vector.broadcast %28 : i32 to vector<1x128xi32>
    %31 = arith.addi %30, %29 : vector<1x128xi32>
    %c8_i32 = arith.constant 8 : i32
    %32 = vector.broadcast %c8_i32 : i32 to vector<1x128xi32>
    %33 = arith.cmpi slt, %31, %32 : vector<1x128xi32>
    %34 = arith.addf %23, %27 : vector<1x128xf32>
    %cst_13 = arith.constant 0.000000e+00 : f32
    %35 = vector.broadcast %cst_13 : f32 to vector<1x128xf32>
    %36 = arith.select %33, %34, %35 : vector<1x128xi1>, vector<1x128xf32>
    %c0_14 = arith.constant 0 : index
    %c0_15 = arith.constant 0 : index
    %37 = vector.load %arg5[%c0_14, %c0_15] : memref<1x1xf32, #tpu.memory_space<vmem>>, vector<1x1xf32>
    %38 = vector.shape_cast %36 : vector<1x128xf32> to vector<1x1x128xf32>
    %cst_16 = arith.constant dense<0.000000e+00> : vector<1xf32>
    %39 = vector.multi_reduction <add>, %38, %cst_16 [1, 2] : vector<1x1x128xf32> to vector<1xf32>
    %40 = vector.shape_cast %39 : vector<1xf32> to vector<1x1x1xf32>
    %41 = vector.extract %40[0, 0, 0] : f32 from vector<1x1x1xf32>
    %42 = vector.broadcast %41 : f32 to vector<1x1xf32>
    %43 = arith.addf %37, %42 : vector<1x1xf32>
    %c0_17 = arith.constant 0 : index
    %c0_18 = arith.constant 0 : index
    %44 = vector.load %arg5[%c0_17, %c0_18] : memref<1x1xf32, #tpu.memory_space<vmem>>, vector<1x1xf32>
    tpu.vector_store %arg5[%c0_17, %c0_18], %43 {strides = array<i32>} : memref<1x1xf32, #tpu.memory_space<vmem>>, vector<1x1xf32>,
    %c0_i32_19 = arith.constant 0 : i32
    %45 = arith.cmpi eq, %arg0, %c0_i32_19 : i32
    %46 = arith.extui %45 : i1 to i32
    %c0_i32_20 = arith.constant 0 : i32
    %47 = arith.cmpi ne, %46, %c0_i32_20 : i32
    scf.if %47 {
      %c0_21 = arith.constant 0 : index
      %c0_22 = arith.constant 0 : index
      %48 = vector.load %arg5[%c0_21, %c0_22] : memref<1x1xf32, #tpu.memory_space<vmem>>, vector<1x1xf32>
      %cst_23 = arith.constant 1.250000e-01 : f32
      %49 = vector.broadcast %cst_23 : f32 to vector<1x1xf32>
      %50 = arith.mulf %48, %49 : vector<1x1xf32>
      %c0_24 = arith.constant 0 : index
      %c0_25 = arith.constant 0 : index
      %51 = vector.load %arg4[%c0_24, %c0_25] : memref<1x1xf32, #tpu.memory_space<vmem>>, vector<1x1xf32>
      tpu.vector_store %arg4[%c0_24, %c0_25], %50 {strides = array<i32>} : memref<1x1xf32, #tpu.memory_space<vmem>>, vector<1x1xf32>,
    } else {
    }
    return
  }
  func.func @transform_0(%arg0: i32) -> (i32, i32) {
    %c0_i32 = arith.constant 0 : i32
    %c0_i32_0 = arith.constant 0 : i32
    return %c0_i32, %arg0 : i32, i32
  }
  func.func @transform_1(%arg0: i32) -> (i32, i32) {
    %c0_i32 = arith.constant 0 : i32
    %c0_i32_0 = arith.constant 0 : i32
    return %c0_i32, %arg0 : i32, i32
  }
  func.func @transform_2(%arg0: i32) -> (i32, i32) {
    %c0_i32 = arith.constant 0 : i32
    %c0_i32_0 = arith.constant 0 : i32
    return %c0_i32, %arg0 : i32, i32
  }
  func.func @transform_3(%arg0: i32) -> (i32, i32) {
    %c0_i32 = arith.constant 0 : i32
    %c0_i32_0 = arith.constant 0 : i32
    %c0_i32_1 = arith.constant 0 : i32
    return %c0_i32, %c0_i32_0 : i32, i32
  }
}

</mosaic_0001>

<llo_original>
// kernel: tpu_custom_call.1
$region0: #{tpu_custom_call.1}
  #allocation0 [shape = 'u32[]', space=smem, size = 0x4, offset = 0x4, fixed_abs, tag = 'smem constant byte address 0x4 - core index']
  #allocation1 [shape = 'u32[144,128]{1,0:T(1,128)}', space=vmem, size = 0x12000, scoped, tag = 'internal scratch']
  #allocation2 [shape = 'f32[1,1]{1,0:T(1,128)}', space=vmem, size = 0x200, scoped, tag = 'scratch operand']
  %s0 = inlined_call_operand.hbm [shape: f32[32,128], index: 0, kind: input, shape index: {}]
  %s1 = inlined_call_operand.hbm [shape: f32[32,128], index: 1, kind: input, shape index: {}]
  %s2 = inlined_call_operand.hbm [shape: f32[32,128], index: 2, kind: input, shape index: {}]
  %s3 = inlined_call_operand.hbm [shape: f32[1,1], index: 3, kind: output, shape index: {}]
  %s4 = sld [smem:[#allocation0]]
  $region42: #{tpu_custom_call.1} parent=0
    _
  %s6 = ssub.s32 1, %s4
  %s7 = scalar_select 0, %s6, %s4
  $region1: #{tpu_custom_call.1} parent=0
    #allocation3 [shape = 'u8[16384]{0}', space=vmem, size = 0x4000, scoped, tag = 'input window, operand 0, single buffered']
    #allocation4 [shape = 's32[1]{0}', space=sflag, size = 0x4, scoped, tag = 'scoped memory for tpu_custom_call.1']
    #allocation5 [shape = 's32[1]{0}', space=sflag, size = 0x4, scoped, tag = 'scoped memory for tpu_custom_call.1']
    #allocation6 [shape = 'u8[16384]{0}', space=vmem, size = 0x4000, scoped, tag = 'input window, operand 1, single buffered']
    #allocation7 [shape = 's32[1]{0}', space=sflag, size = 0x4, scoped, tag = 'scoped memory for tpu_custom_call.1']
    #allocation8 [shape = 'u8[16384]{0}', space=vmem, size = 0x4000, scoped, tag = 'input window, operand 2, single buffered']
    #allocation9 [shape = 'u8[512]{0}', space=vmem, size = 0x400, scoped, tag = 'output window, operand 0, single buffered']
    %8 = vsyncpa [#allocation4], 0
    %9 = vsyncpa [#allocation7], 0
    %10 = vsyncpa [#allocation5], 0
    // Predicated region
    $region2: #{tpu_custom_call.1} parent=1 // pred_check
      _
    $region3: #{tpu_custom_call.1} parent=1 // pred_check_branch
      %12 = sbr.rel (0) target = $region5
    $region4: #{tpu_custom_call.1} parent=1 // pred_region
      %s14 = ssub.s32 512, 512
      %15 = vsyncadd [#allocation4], %s14
      %s16 = sshll.u32 [#allocation3], 4
      %s17 = int_to_ptr.vmem [resolvable:$true] %s16
      %22 = dma.hbm_to_vmem [thread:$0]  %s0, 512, %s17, [#allocation4], 128, 128, 8
    $region5: #{tpu_custom_call.1} parent=1 // pred_fallthru
      _
    // Predicated region
    $region6: #{tpu_custom_call.1} parent=1 // pred_check
      _
    $region7: #{tpu_custom_call.1} parent=1 // pred_check_branch
      %24 = sbr.rel (0) target = $region9
    $region8: #{tpu_custom_call.1} parent=1 // pred_region
      %s26 = ssub.s32 512, 512
      %27 = vsyncadd [#allocation7], %s26
      %s28 = sshll.u32 [#allocation6], 4
      %s29 = int_to_ptr.vmem [resolvable:$true] %s28
      %34 = dma.hbm_to_vmem [thread:$0]  %s1, 512, %s29, [#allocation7], 128, 128, 8
    $region9: #{tpu_custom_call.1} parent=1 // pred_fallthru
      _
    // Predicated region
    $region10: #{tpu_custom_call.1} parent=1 // pred_check
      _
    $region11: #{tpu_custom_call.1} parent=1 // pred_check_branch
      %36 = sbr.rel (0) target = $region13
    $region12: #{tpu_custom_call.1} parent=1 // pred_region
      %s38 = ssub.s32 512, 512
      %39 = vsyncadd [#allocation7], %s38
      %s40 = sshll.u32 [#allocation8], 4
      %s41 = int_to_ptr.vmem [resolvable:$true] %s40
      %46 = dma.hbm_to_vmem [thread:$0]  %s2, 512, %s41, [#allocation7], 128, 128, 8
    $region13: #{tpu_custom_call.1} parent=1 // pred_fallthru
      _
    // Predicated region
    $region14: #{tpu_custom_call.1} parent=1 // pred_check
      _
    $region15: #{tpu_custom_call.1} parent=1 // pred_check_branch
      %48 = sbr.rel (0) target = $region17
    $region16: #{tpu_custom_call.1} parent=1 // pred_region
      %49 = dma.done [#allocation4], 512
    $region17: #{tpu_custom_call.1} parent=1 // pred_fallthru
      _
    // Predicated region
    $region18: #{tpu_custom_call.1} parent=1 // pred_check
      _
    $region19: #{tpu_custom_call.1} parent=1 // pred_check_branch
      %51 = sbr.rel (0) target = $region21
    $region20: #{tpu_custom_call.1} parent=1 // pred_region
      %52 = dma.done [#allocation7], 512
    $region21: #{tpu_custom_call.1} parent=1 // pred_fallthru
      _
    // Predicated region
    $region22: #{tpu_custom_call.1} parent=1 // pred_check
      _
    $region23: #{tpu_custom_call.1} parent=1 // pred_check_branch
      %54 = sbr.rel (0) target = $region25
    $region24: #{tpu_custom_call.1} parent=1 // pred_region
      %55 = dma.done [#allocation7], 512
    $region25: #{tpu_custom_call.1} parent=1 // pred_fallthru
      _
    %p56 = scmp.eq.s32.totalorder 0, 0
    // Predicated region
    $region26: #{tpu_custom_call.1} parent=1 // pred_check
      %p57 = pneg %p56
    $region27: #{tpu_custom_call.1} parent=1 // pred_check_branch
      %59 = sbr.rel (%p57) target = $region29
    $region28: #{tpu_custom_call.1} parent=1 // pred_region
      %vm60 = vcmask 0
      %61 = vst.msk [vmem:[#allocation2] sm:$0x1] %vm60, 0.0
    $region29: #{tpu_custom_call.1} parent=1 // pred_fallthru
      _
    %v62 = vld [vmem:[#allocation3] sm:$0xff]
    %v63 = vld [vmem:[#allocation3 + $0x8] sm:$0xff]
    %v64 = vld [vmem:[#allocation3 + $0x10] sm:$0xff]
    %v65 = vld [vmem:[#allocation3 + $0x18] sm:$0xff]
    %v66 = vld [vmem:[#allocation6] sm:$0xff]
    %v67 = vld [vmem:[#allocation6 + $0x8] sm:$0xff]
    %v68 = vld [vmem:[#allocation6 + $0x10] sm:$0xff]
    %v69 = vld [vmem:[#allocation6 + $0x18] sm:$0xff]
    %v70 = vld [vmem:[#allocation8] sm:$0xff]
    %v71 = vld [vmem:[#allocation8 + $0x8] sm:$0xff]
    %v72 = vld [vmem:[#allocation8 + $0x10] sm:$0xff]
    %v73 = vld [vmem:[#allocation8 + $0x18] sm:$0xff]
    %v74 = vsub.f32 %v62, %v66
    %v75 = vsub.f32 %v63, %v67
    %v76 = vsub.f32 %v64, %v68
    %v77 = vsub.f32 %v65, %v69
    %v78 = vadd.f32 %v74, 1e-06
    %v79 = vadd.f32 %v75, 1e-06
    %v80 = vadd.f32 %v76, 1e-06
    %v81 = vadd.f32 %v77, 1e-06
    %v82 = vsub.f32 %v62, %v70
    %v83 = vsub.f32 %v63, %v71
    %v84 = vsub.f32 %v64, %v72
    %v85 = vsub.f32 %v65, %v73
    %v86 = vadd.f32 %v82, 1e-06
    %v87 = vadd.f32 %v83, 1e-06
    %v88 = vadd.f32 %v84, 1e-06
    %v89 = vadd.f32 %v85, 1e-06
    %v90 = vmul.f32 %v78, %v78
    %v91 = vmul.f32 %v79, %v79
    %v92 = vmul.f32 %v80, %v80
    %v93 = vmul.f32 %v81, %v81
    %v94 = vadd.f32 %v90, %v91
    %v95 = vadd.f32 %v94, %v92
    %v96 = vadd.f32 %v95, %v93
    %v97 = vrot.slane %v96, 4
    %v98 = vadd.f32 %v96, %v97
    %v99 = vrot.slane %v98, 2
    %v100 = vadd.f32 %v98, %v99
    %v101 = vrot.slane %v100, 1
    %v102 = vadd.f32 %v100, %v101
    %v103 = vrsqrt.pop %v102
    %v104 = vmul.f32 %v102, %v103
    %vm105 = vcmp.eq.f32.partialorder %v102, inf
    %v106 = vsel %vm105, %v102, %v104
    %vm107 = vcmp.eq.f32.partialorder %v102, 0.0
    %v108 = vand.u32 %v102, 2147483648
    %v109 = vsel %vm107, %v108, %v106
    %v110 = vmul.f32 %v86, %v86
    %v111 = vmul.f32 %v87, %v87
    %v112 = vmul.f32 %v88, %v88
    %v113 = vmul.f32 %v89, %v89
    %v114 = vadd.f32 %v110, %v111
    %v115 = vadd.f32 %v114, %v112
    %v116 = vadd.f32 %v115, %v113
    %v117 = vrot.slane %v116, 4
    %v118 = vadd.f32 %v116, %v117
    %v119 = vrot.slane %v118, 2
    %v120 = vadd.f32 %v118, %v119
    %v121 = vrot.slane %v120, 1
    %v122 = vadd.f32 %v120, %v121
    %v123 = vrsqrt.pop %v122
    %v124 = vmul.f32 %v122, %v123
    %vm125 = vcmp.eq.f32.partialorder %v122, inf
    %v126 = vsel %vm125, %v122, %v124
    %vm127 = vcmp.eq.f32.partialorder %v122, 0.0
    %v128 = vand.u32 %v122, 2147483648
    %v129 = vsel %vm127, %v128, %v126
    %v130 = vmax.f32 %v109, 0.0
    %v131 = vsub.f32 1.0, %v129
    %v132 = vmax.f32 %v131, 0.0
    %s133 = smul.u32 0, 128
    %v134 = vlaneseq
    %v135 = vand.u32 %v134, 127
    %v136 = vstv %s133
    %v137 = vadd.s32 %v136, %v135
    %vm138 = vcmp.lt.s32.totalorder %v137, 8
    %v139 = vadd.f32 %v130, %v132
    %v140 = vsel %vm138, %v139, 0.0
    %v141 = vld [vmem:[#allocation2] sm:$0x1]
    %vm142 = vcmask 1040384
    %v143 = vsel %vm142, %v140, 0.0
    %144 = vadd.xlane.f32.xlu0 %v143
    %v145 = vpop.xlane.xlu0 %144
    %v146 = vrot.slane %v145, 4
    %v147 = vadd.f32 %v145, %v146
    %v148 = vrot.slane %v147, 2
    %v149 = vadd.f32 %v147, %v148
    %v150 = vrot.slane %v149, 1
    %v151 = vadd.f32 %v149, %v150
    %s152 = vtos %v151
    %v153 = vstv %s152
    %v154 = vadd.f32 %v141, %v153
    %vm155 = vcmask 0
    %156 = vst.msk [vmem:[#allocation2] sm:$0x1] %vm155, %v154
    // Predicated region
    $region30: #{tpu_custom_call.1} parent=1 // pred_check
      %p157 = pneg %p56
    $region31: #{tpu_custom_call.1} parent=1 // pred_check_branch
      %159 = sbr.rel (%p157) target = $region33
    $region32: #{tpu_custom_call.1} parent=1 // pred_region
      %v160 = vld [vmem:[#allocation2] sm:$0x1]
      %v161 = vmul.f32 %v160, 0.125
      %162 = vst.msk [vmem:[#allocation9] sm:$0x1] %vm155, %v161
    $region33: #{tpu_custom_call.1} parent=1 // pred_fallthru
      _
    // Predicated region
    $region34: #{tpu_custom_call.1} parent=1 // pred_check
      _
    $region35: #{tpu_custom_call.1} parent=1 // pred_check_branch
      %164 = sbr.rel (0) target = $region37
    $region36: #{tpu_custom_call.1} parent=1 // pred_region
      %s166 = ssub.s32 16, 16
      %167 = vsyncadd [#allocation5], %s166
      %s169 = sshll.u32 [#allocation9], 4
      %s170 = int_to_ptr.vmem [resolvable:$true] %s169
      %172 = dma.vmem_to_hbm [thread:$0]  %s170, 16, %s3, [#allocation5]
    $region37: #{tpu_custom_call.1} parent=1 // pred_fallthru
      _
    // Predicated region
    $region38: #{tpu_custom_call.1} parent=1 // pred_check
      _
    $region39: #{tpu_custom_call.1} parent=1 // pred_check_branch
      %174 = sbr.rel (0) target = $region41
    $region40: #{tpu_custom_call.1} parent=1 // pred_region
      %175 = dma.done [#allocation5], 16
    $region41: #{tpu_custom_call.1} parent=1 // pred_fallthru
      _
    %176 = vsyncpa [#allocation4], 1
    %177 = vsyncpa [#allocation7], 1
    %178 = vsyncpa [#allocation5], 1

</llo_original>
